<compile_context>
chip_gen: v7x
topology: tpu7x:2x2x1
jax: 0.10.0
libtpu: 0.0.40
codegen_flags: <defaults>
</compile_context>

<pallas_src>
import jax
import jax.numpy as jnp
from jax.experimental import pallas as pl
from jax.experimental.pallas import tpu as pltpu

LANES = 1024  # lane-dense row width (multiple of 128); 8 vregs per row


def linear_kernel(x_ref, w_ref, b_ref, o_ref):
    # x_ref: (tile_rows, LANES) VMEM block; w_ref, b_ref: (1, 1) SMEM scalars.
    w = w_ref[0, 0]
    b = b_ref[0, 0]
    # y = x * W[0,0] + b[0]  == nn.Linear(1, 1).  Pure VPU, full-vreg stores.
    o_ref[...] = x_ref[...] * w + b


def _device_tuning():
    """Per-generation (max_tile_rows, vmem_limit_bytes)."""
    try:
        kind = jax.devices()[0].device_kind.lower()
    except Exception:
        kind = ""
    if "v7" in kind or "7x" in kind:
        # 8 MiB blocks; 2 streams x 2 buffers = 32 MiB, under 64 MiB/TC VMEM.
        return 2048, 48 * 1024 * 1024
    if "v6" in kind:
        # 4 MiB blocks (~86% of HBM roofline measured at this size on v6e).
        return 1024, 32 * 1024 * 1024
    # v5e and anything else: 2 MiB blocks already amortize per-step overhead.
    return 512, 32 * 1024 * 1024


def _pick_tile_rows(rows, max_tile_rows):
    """Row-tile: multiple of 8 (or full extent), aiming for >= ~4 grid steps."""
    if rows <= 8:
        return int(rows)               # block == full array extent
    target = pl.cdiv(rows, 4)          # at least ~4 pipelined / shardable steps
    target = ((target + 7) // 8) * 8   # keep the sublane dim a multiple of 8
    return int(min(max(target, 8), max_tile_rows))


def linear_regression_forward(x, weight, bias):
    """x: (N, 1) f32, weight: (1, 1) f32, bias: (1,) f32 -> (N, 1) f32."""
    n, f = x.shape
    assert f == 1, "LinearRegression expects in_features == 1"
    w2d = weight.reshape(1, 1).astype(jnp.float32)
    b2d = bias.reshape(1, 1).astype(jnp.float32)

    # Lane-dense view: (N, 1) -> (rows, LANES).  Fast path when N % LANES == 0:
    # no pad, no slice.  Otherwise pad by <= LANES-1 elements only; the partial
    # last grid block is masked by Pallas (OOB writes dropped).
    x_flat = x.reshape(-1).astype(jnp.float32)
    pad = (-n) % LANES
    if pad:
        x_flat = jnp.pad(x_flat, (0, pad))
    rows = (n + pad) // LANES
    x2d = x_flat.reshape(rows, LANES)

    max_tile_rows, vmem_limit = _device_tuning()
    tile_rows = _pick_tile_rows(rows, max_tile_rows)
    grid_len = int(pl.cdiv(rows, tile_rows))

    block_bytes = tile_rows * LANES * 4
    # Deeper input pipelining only where it is cheap (small blocks, real grid).
    if grid_len >= 4 and block_bytes <= 4 * 1024 * 1024:
        x_spec = pl.BlockSpec((tile_rows, LANES), lambda i: (i, 0),
                              pipeline_mode=pl.Buffered(3))
    else:
        x_spec = pl.BlockSpec((tile_rows, LANES), lambda i: (i, 0))

    elems = rows * LANES
    out2d = pl.pallas_call(
        linear_kernel,
        out_shape=jax.ShapeDtypeStruct((rows, LANES), jnp.float32),
        grid=(grid_len,),
        in_specs=[
            x_spec,                                             # x tile in VMEM
            pl.BlockSpec(memory_space=pltpu.MemorySpace.SMEM),  # weight scalar
            pl.BlockSpec(memory_space=pltpu.MemorySpace.SMEM),  # bias scalar
        ],
        out_specs=pl.BlockSpec((tile_rows, LANES), lambda i: (i, 0)),
        compiler_params=pltpu.CompilerParams(
            dimension_semantics=("parallel",),  # shard row tiles across TCs (v7x)
            vmem_limit_bytes=vmem_limit,
        ),
        cost_estimate=pl.CostEstimate(
            flops=2 * elems, transcendentals=0, bytes_accessed=8 * elems),
    )(x2d, w2d, b2d)

    out_flat = out2d.reshape(-1)
    if pad:
        out_flat = out_flat[:n]  # drop the <= LANES-1 padded tail (holds `b`)
    return out_flat.reshape(n, 1)


if __name__ == "__main__":
    key = jax.random.PRNGKey(0)
    kx, kw, kb = jax.random.split(key, 3)

    # Deterministic parameter init mimicking nn.Linear(1, 1) default
    # (uniform in [-1/sqrt(fan_in), 1/sqrt(fan_in)] with fan_in = 1).
    weight = jax.random.uniform(kw, (1, 1), dtype=jnp.float32, minval=-1.0, maxval=1.0)
    bias = jax.random.uniform(kb, (1,), dtype=jnp.float32, minval=-1.0, maxval=1.0)

    # Exercise: tiny batch, LANES-aligned fast path, and partial-block + pad path.
    for N in (8, 2048, 40000):
        x = jax.random.normal(kx, (N, 1), dtype=jnp.float32)
        y = linear_regression_forward(x, weight, bias)
        y = jax.block_until_ready(y)
        y_ref = x @ weight.T + bias
        assert y.shape == (N, 1), (y.shape, N)
        assert jnp.allclose(y, y_ref, atol=1e-6, rtol=1e-6), f"mismatch at N={N}"

    print("KERNEL_OK")
</pallas_src>

<mosaic_0001>
module attributes {stable_mosaic.version = 11 : i64} {
  func.func @linear_kernel(%arg0: i32, %arg1: memref<1x1024xf32, #tpu.memory_space<vmem>>, %arg2: memref<1x1xf32, #tpu.memory_space<smem>>, %arg3: memref<1x1xf32, #tpu.memory_space<smem>>, %arg4: memref<1x1024xf32, #tpu.memory_space<vmem>>) attributes {dimension_semantics = [#tpu.dimension_semantics<parallel>], iteration_bounds = array<i64: 1>, scalar_prefetch = 0 : i64, scratch_operands = 0 : i64, tpu.core_type = #tpu.core_type<tc>, window_params = [{transform_indices = @transform_0, window_bounds = array<i64: 1, 1024>}, {transform_indices = @transform_1, window_bounds = array<i64: 1, 1>}, {transform_indices = @transform_2, window_bounds = array<i64: 1, 1>}, {transform_indices = @transform_3, window_bounds = array<i64: 1, 1024>}]} {
    %c0 = arith.constant 0 : index
    %c0_0 = arith.constant 0 : index
    %0 = memref.load %arg2[%c0, %c0_0] : memref<1x1xf32, #tpu.memory_space<smem>>
    %c0_1 = arith.constant 0 : index
    %c0_2 = arith.constant 0 : index
    %1 = memref.load %arg3[%c0_1, %c0_2] : memref<1x1xf32, #tpu.memory_space<smem>>
    %c0_3 = arith.constant 0 : index
    %c0_4 = arith.constant 0 : index
    %2 = vector.load %arg1[%c0_3, %c0_4] : memref<1x1024xf32, #tpu.memory_space<vmem>>, vector<1x1024xf32>
    %3 = vector.broadcast %0 : f32 to vector<1x1024xf32>
    %4 = arith.mulf %2, %3 : vector<1x1024xf32>
    %5 = vector.broadcast %1 : f32 to vector<1x1024xf32>
    %6 = arith.addf %4, %5 : vector<1x1024xf32>
    %c0_5 = arith.constant 0 : index
    %c0_6 = arith.constant 0 : index
    %7 = vector.load %arg4[%c0_5, %c0_6] : memref<1x1024xf32, #tpu.memory_space<vmem>>, vector<1x1024xf32>
    tpu.vector_store %arg4[%c0_5, %c0_6], %6 {strides = array<i32>} : memref<1x1024xf32, #tpu.memory_space<vmem>>, vector<1x1024xf32>,
    return
  }
  func.func @transform_0(%arg0: i32) -> (i32, i32) {
    %c0_i32 = arith.constant 0 : i32
    %c0_i32_0 = arith.constant 0 : i32
    return %arg0, %c0_i32 : i32, i32
  }
  func.func @transform_1(%arg0: i32) -> (i32, i32) {
    %c0_i32 = arith.constant 0 : i32
    %c0_i32_0 = arith.constant 0 : i32
    %c0_i32_1 = arith.constant 0 : i32
    return %c0_i32, %c0_i32_0 : i32, i32
  }
  func.func @transform_2(%arg0: i32) -> (i32, i32) {
    %c0_i32 = arith.constant 0 : i32
    %c0_i32_0 = arith.constant 0 : i32
    %c0_i32_1 = arith.constant 0 : i32
    return %c0_i32, %c0_i32_0 : i32, i32
  }
  func.func @transform_3(%arg0: i32) -> (i32, i32) {
    %c0_i32 = arith.constant 0 : i32
    %c0_i32_0 = arith.constant 0 : i32
    return %arg0, %c0_i32 : i32, i32
  }
}

</mosaic_0001>

<llo_original>
// kernel: tpu_custom_call.1
$region0: #{tpu_custom_call.1}
  #allocation0 [shape = 'u32[]', space=smem, size = 0x4, offset = 0x4, fixed_abs, tag = 'smem constant byte address 0x4 - core index']
  #allocation1 [shape = 'u32[144,128]{1,0:T(1,128)}', space=vmem, size = 0x12000, scoped, tag = 'internal scratch']
  #allocation2 [shape = 'f32[1,1]{1,0:T(1,128)S(6)}', space=smem, size = 0x200, scoped, tag = 'scoped memory for tpu_custom_call.1']
  #allocation3 [shape = 'f32[1,1]{1,0:T(1,128)S(6)}', space=smem, size = 0x200, scoped, tag = 'scoped memory for tpu_custom_call.1']
  %s0 = inlined_call_operand.hbm [shape: f32[1,1024], index: 0, kind: input, shape index: {}]
  %s1 = inlined_call_operand.<no memory space> [shape: f32[1,1], index: 1, kind: input, shape index: {}]
  %s2 = inlined_call_operand.<no memory space> [shape: f32[1,1], index: 2, kind: input, shape index: {}]
  %s3 = inlined_call_operand.hbm [shape: f32[1,1024], index: 3, kind: output, shape index: {}]
  %s4 = sld [smem:[#allocation0]]
  $region26: #{tpu_custom_call.1} parent=0
    _
  %s6 = ssub.s32 1, %s4
  %s7 = scalar_select 0, %s6, %s4
  %8 = sst [smem:[#allocation2]] %s1
  %9 = sst [smem:[#allocation3]] %s2
  $region1: #{tpu_custom_call.1} parent=0
    #allocation4 [shape = 'u8[4096]{0}', space=vmem, size = 0x1000, scoped, tag = 'input window, operand 0, single buffered']
    #allocation5 [shape = 's32[1]{0}', space=sflag, size = 0x4, scoped, tag = 'scoped memory for tpu_custom_call.1']
    #allocation6 [shape = 's32[1]{0}', space=sflag, size = 0x4, scoped, tag = 'scoped memory for tpu_custom_call.1']
    #allocation7 [shape = 'u8[4096]{0}', space=vmem, size = 0x1000, scoped, tag = 'output window, operand 0, single buffered']
    %10 = vsyncpa [#allocation5], 0
    %11 = vsyncpa [#allocation6], 0
    // Predicated region
    $region2: #{tpu_custom_call.1} parent=1 // pred_check
      _
    $region3: #{tpu_custom_call.1} parent=1 // pred_check_branch
      %13 = sbr.rel (0) target = $region5
    $region4: #{tpu_custom_call.1} parent=1 // pred_region
      %s15 = ssub.s32 128, 128
      %16 = vsyncadd [#allocation5], %s15
      %s18 = sshll.u32 [#allocation4], 4
      %s19 = int_to_ptr.vmem [resolvable:$true] %s18
      %21 = dma.hbm_to_vmem [thread:$0]  %s0, 128, %s19, [#allocation5]
    $region5: #{tpu_custom_call.1} parent=1 // pred_fallthru
      _
    // Predicated region
    $region6: #{tpu_custom_call.1} parent=1 // pred_check
      _
    $region7: #{tpu_custom_call.1} parent=1 // pred_check_branch
      %23 = sbr.rel (0) target = $region9
    $region8: #{tpu_custom_call.1} parent=1 // pred_region
      _
    $region9: #{tpu_custom_call.1} parent=1 // pred_fallthru
      _
    // Predicated region
    $region10: #{tpu_custom_call.1} parent=1 // pred_check
      _
    $region11: #{tpu_custom_call.1} parent=1 // pred_check_branch
      %25 = sbr.rel (0) target = $region13
    $region12: #{tpu_custom_call.1} parent=1 // pred_region
      _
    $region13: #{tpu_custom_call.1} parent=1 // pred_fallthru
      _
    // Predicated region
    $region14: #{tpu_custom_call.1} parent=1 // pred_check
      _
    $region15: #{tpu_custom_call.1} parent=1 // pred_check_branch
      %27 = sbr.rel (0) target = $region17
    $region16: #{tpu_custom_call.1} parent=1 // pred_region
      %28 = dma.done [#allocation5], 128
    $region17: #{tpu_custom_call.1} parent=1 // pred_fallthru
      _
    %s29 = sld [smem:[#allocation2]]
    %s30 = sld [smem:[#allocation3]]
    %v31 = vld [vmem:[#allocation4] sm:$0xff]
    %v32 = vstv %s29
    %v33 = vmul.f32 %v31, %v32
    %v34 = vstv %s30
    %v35 = vadd.f32 %v33, %v34
    %36 = vst [vmem:[#allocation7] sm:$0xff] %v35
    // Predicated region
    $region18: #{tpu_custom_call.1} parent=1 // pred_check
      _
    $region19: #{tpu_custom_call.1} parent=1 // pred_check_branch
      %38 = sbr.rel (0) target = $region21
    $region20: #{tpu_custom_call.1} parent=1 // pred_region
      %s40 = ssub.s32 128, 128
      %41 = vsyncadd [#allocation6], %s40
      %s43 = sshll.u32 [#allocation7], 4
      %s44 = int_to_ptr.vmem [resolvable:$true] %s43
      %46 = dma.vmem_to_hbm [thread:$0]  %s44, 128, %s3, [#allocation6]
    $region21: #{tpu_custom_call.1} parent=1 // pred_fallthru
      _
    // Predicated region
    $region22: #{tpu_custom_call.1} parent=1 // pred_check
      _
    $region23: #{tpu_custom_call.1} parent=1 // pred_check_branch
      %48 = sbr.rel (0) target = $region25
    $region24: #{tpu_custom_call.1} parent=1 // pred_region
      %49 = dma.done [#allocation6], 128
    $region25: #{tpu_custom_call.1} parent=1 // pred_fallthru
      _
    %50 = vsyncpa [#allocation5], 1
    %51 = vsyncpa [#allocation6], 1

</llo_original>
